<compile_context>
chip_gen: v5e
topology: v5e:2x2
jax: 0.10.0
libtpu: 0.0.40
codegen_flags: <defaults>
</compile_context>

<pallas_src>
import functools

import jax
import jax.numpy as jnp
from jax.experimental import pallas as pl
from jax.experimental.pallas import tpu as pltpu


def _round_up(n: int, m: int) -> int:
    return ((n + m - 1) // m) * m


def qnet_kernel(x_ref, w1_ref, b1_ref, w2_ref, b2_ref, o_ref):
    """One batch tile, fully VMEM-resident: relu(x @ W1 + b1) @ W2 + b2."""
    # Cast activations to the (pre-cast) weight dtype inside the kernel: the
    # cast rides the VPU, x's HBM stream keeps its original width, and no
    # separate casted copy is materialized in the wrapper.
    x = x_ref[...].astype(w1_ref.dtype)
    # Layer 1 on the MXU, f32 accumulation.
    h = jnp.dot(x, w1_ref[...], preferred_element_type=jnp.float32)
    # Bias + ReLU in f32 (v5e-safe elementwise path).
    h = jnp.maximum(h + b1_ref[...], 0.0)
    # Layer 2: activations back to weight dtype for the MXU, f32 accumulate.
    y = jnp.dot(h.astype(w2_ref.dtype), w2_ref[...],
                preferred_element_type=jnp.float32)
    o_ref[...] = (y + b2_ref[...]).astype(o_ref.dtype)


def prepare_params(w1, b1, w2, b2, *, matmul_dtype=jnp.bfloat16):
    """One-time parameter prep (hoisted out of the per-call path).

    Weights are stored in [in, out] layout and cast once to the MXU operand
    dtype (bf16 halves the weight HBM stream; f32 keeps strict parity).
    Biases stay f32 and are shaped (1, features) for broadcasting.
    """
    mm = jnp.dtype(matmul_dtype)
    return (w1.astype(mm),
            b1.reshape(1, -1).astype(jnp.float32),
            w2.astype(mm),
            b2.reshape(1, -1).astype(jnp.float32))


@functools.partial(jax.jit, static_argnames=("batch_tile",))
def linear_qnet_forward(x, w1, b1, w2, b2, *, batch_tile=2048):
    """Forward pass of Linear_QNet.

    x:  [B, in]   f32 activations (cast to the weight dtype inside the kernel)
    w1: [in, hid], b1: [1, hid]   (from prepare_params)
    w2: [hid, out], b2: [1, out]
    """
    B, in_f = x.shape
    hid = w1.shape[1]
    out = w2.shape[1]
    assert w1.shape[0] == in_f and w2.shape[0] == hid
    assert b1.shape == (1, hid) and b2.shape == (1, out)

    # --- Batch tile selection -------------------------------------------------
    # Multiple of 16 sublanes (safe for f32 and packed bf16 alike).  For large
    # batches, force >= 2 grid steps so ("parallel",) shards across v7x's two
    # TensorCores; for tiny batches a single step avoids pure-padding steps.
    sub = 16
    n_steps = pl.cdiv(B, batch_tile)
    if B >= 2 * sub:
        n_steps = max(n_steps, 2)
    tb = _round_up(pl.cdiv(B, n_steps), sub)
    b_pad = n_steps * tb

    # Only pad the batch dim, only when needed (no feature-dim padding at all).
    if b_pad != B:
        x = jnp.pad(x, ((0, b_pad - B), (0, 0)))

    # --- Cost estimate from TRUE dims -----------------------------------------
    flops = 2 * B * (in_f * hid + hid * out)
    bytes_accessed = (
        B * in_f * x.dtype.itemsize
        + (in_f * hid + hid * out) * w1.dtype.itemsize
        + (hid + out) * 4
        + B * out * 4
    )

    out_arr = pl.pallas_call(
        qnet_kernel,
        out_shape=jax.ShapeDtypeStruct((b_pad, out), jnp.float32),
        grid=(n_steps,),
        in_specs=[
            # Activations: tiled over the batch grid, true feature width.
            pl.BlockSpec((tb, in_f), lambda i: (i, 0)),
            # Weights / biases: constant index_map -> DMA'd once, VMEM-resident.
            pl.BlockSpec((in_f, hid), lambda i: (0, 0)),
            pl.BlockSpec((1, hid), lambda i: (0, 0)),
            pl.BlockSpec((hid, out), lambda i: (0, 0)),
            pl.BlockSpec((1, out), lambda i: (0, 0)),
        ],
        # True output width (full-array last dim): avoids 32x padded writeback.
        out_specs=pl.BlockSpec((tb, out), lambda i: (i, 0)),
        compiler_params=pltpu.CompilerParams(
            dimension_semantics=("parallel",),
            vmem_limit_bytes=32 * 1024 * 1024,  # portable across v5e/v6e/v7x
        ),
        cost_estimate=pl.CostEstimate(
            flops=int(flops), transcendentals=0,
            bytes_accessed=int(bytes_accessed)),
    )(x, w1, b1, w2, b2)

    return out_arr[:B]


def init_linear_params(key, in_features, out_features):
    """torch.nn.Linear-style init (uniform +/- 1/sqrt(fan_in)).
    Weight returned already transposed to [in_features, out_features]."""
    kw, kb = jax.random.split(key)
    bound = 1.0 / jnp.sqrt(jnp.float32(in_features))
    w = jax.random.uniform(kw, (in_features, out_features), jnp.float32, -bound, bound)
    b = jax.random.uniform(kb, (out_features,), jnp.float32, -bound, bound)
    return w, b


if __name__ == "__main__":
    # Small shapes consistent with the module: Linear(in, hid) -> ReLU -> Linear(hid, out)
    batch, input_size, hidden_size, output_size = 8, 16, 32, 4

    key = jax.random.PRNGKey(0)
    kx, k1, k2, kbig, ksmall = jax.random.split(key, 5)

    x = jax.random.normal(kx, (batch, input_size), jnp.float32)
    w1, b1 = init_linear_params(k1, input_size, hidden_size)
    w2, b2 = init_linear_params(k2, hidden_size, output_size)

    # --- f32 operand path: matches PyTorch forward semantics -----------------
    p32 = prepare_params(w1, b1, w2, b2, matmul_dtype=jnp.float32)
    out = jax.block_until_ready(linear_qnet_forward(x, *p32))
    ref = jnp.maximum(x @ w1 + b1[None, :], 0.0) @ w2 + b2[None, :]
    assert out.shape == (batch, output_size)
    assert jnp.allclose(out, ref, atol=1e-5, rtol=1e-5), "f32 path mismatch"

    # --- bf16 operand path (params cast once), large non-tile-aligned batch --
    pbf = prepare_params(w1, b1, w2, b2, matmul_dtype=jnp.bfloat16)
    big_batch = 1000
    xb = jax.random.normal(kbig, (big_batch, input_size), jnp.float32)
    out_bf = jax.block_until_ready(linear_qnet_forward(xb, *pbf))

    # Reference mirroring the in-kernel cast points (bf16 operands, f32 accum).
    h_ref = jnp.maximum(
        jnp.dot(xb.astype(jnp.bfloat16), w1.astype(jnp.bfloat16),
                preferred_element_type=jnp.float32) + b1[None, :], 0.0)
    ref_bf = jnp.dot(h_ref.astype(jnp.bfloat16), w2.astype(jnp.bfloat16),
                     preferred_element_type=jnp.float32) + b2[None, :]
    ref_f32 = jnp.maximum(xb @ w1 + b1[None, :], 0.0) @ w2 + b2[None, :]

    assert out_bf.shape == (big_batch, output_size)
    assert jnp.allclose(out_bf, ref_bf, atol=2e-3, rtol=2e-3), "bf16 path mismatch"
    assert jnp.allclose(out_bf, ref_f32, atol=1e-1, rtol=1e-1), "bf16 path drifted from f32"

    # --- bf16 operand path, tiny batch: exercises small-B tile/padding rules --
    xs = jax.random.normal(ksmall, (3, input_size), jnp.float32)
    out_s = jax.block_until_ready(linear_qnet_forward(xs, *pbf))
    ref_s = jnp.maximum(xs @ w1 + b1[None, :], 0.0) @ w2 + b2[None, :]
    assert out_s.shape == (3, output_size)
    assert jnp.allclose(out_s, ref_s, atol=5e-2, rtol=5e-2), "bf16 small-batch mismatch"

    print("KERNEL_OK")
</pallas_src>

<mosaic_0001>
module attributes {stable_mosaic.version = 11 : i64} {
  func.func @qnet_kernel(%arg0: i32, %arg1: memref<16x16xf32, #tpu.memory_space<vmem>>, %arg2: memref<16x32xf32, #tpu.memory_space<vmem>>, %arg3: memref<1x32xf32, #tpu.memory_space<vmem>>, %arg4: memref<32x4xf32, #tpu.memory_space<vmem>>, %arg5: memref<1x4xf32, #tpu.memory_space<vmem>>, %arg6: memref<16x4xf32, #tpu.memory_space<vmem>>) attributes {dimension_semantics = [#tpu.dimension_semantics<parallel>], iteration_bounds = array<i64: 1>, scalar_prefetch = 0 : i64, scratch_operands = 0 : i64, tpu.core_type = #tpu.core_type<tc>, window_params = [{transform_indices = @transform_0, window_bounds = array<i64: 16, 16>}, {pipeline_mode = #tpu.pipeline_mode<synchronous>, transform_indices = @transform_1, window_bounds = array<i64: 16, 32>}, {pipeline_mode = #tpu.pipeline_mode<synchronous>, transform_indices = @transform_2, window_bounds = array<i64: 1, 32>}, {pipeline_mode = #tpu.pipeline_mode<synchronous>, transform_indices = @transform_3, window_bounds = array<i64: 32, 4>}, {pipeline_mode = #tpu.pipeline_mode<synchronous>, transform_indices = @transform_4, window_bounds = array<i64: 1, 4>}, {transform_indices = @transform_5, window_bounds = array<i64: 16, 4>}]} {
    %c0 = arith.constant 0 : index
    %c0_0 = arith.constant 0 : index
    %0 = vector.load %arg1[%c0, %c0_0] : memref<16x16xf32, #tpu.memory_space<vmem>>, vector<16x16xf32>
    %c0_1 = arith.constant 0 : index
    %c0_2 = arith.constant 0 : index
    %1 = vector.load %arg2[%c0_1, %c0_2] : memref<16x32xf32, #tpu.memory_space<vmem>>, vector<16x32xf32>
    %cst = arith.constant dense<0.000000e+00> : vector<16x32xf32>
    %2 = tpu.matmul %0, %1, %cst {dimension_numbers = #tpu.dot_dimension_numbers<[1], [0], [0], [1], [0, 0, 1, 1], [], []>} : vector<16x16xf32>, vector<16x32xf32>, vector<16x32xf32> -> vector<16x32xf32>
    %c0_3 = arith.constant 0 : index
    %c0_4 = arith.constant 0 : index
    %3 = vector.load %arg3[%c0_3, %c0_4] : memref<1x32xf32, #tpu.memory_space<vmem>>, vector<1x32xf32>
    %4 = vector.broadcast %3 : vector<1x32xf32> to vector<16x32xf32>
    %5 = arith.addf %2, %4 : vector<16x32xf32>
    %cst_5 = arith.constant 0.000000e+00 : f32
    %6 = vector.broadcast %cst_5 : f32 to vector<16x32xf32>
    %7 = arith.maximumf %5, %6 : vector<16x32xf32>
    %c0_6 = arith.constant 0 : index
    %c0_7 = arith.constant 0 : index
    %8 = vector.load %arg4[%c0_6, %c0_7] : memref<32x4xf32, #tpu.memory_space<vmem>>, vector<32x4xf32>
    %cst_8 = arith.constant dense<0.000000e+00> : vector<16x4xf32>
    %9 = tpu.matmul %7, %8, %cst_8 {dimension_numbers = #tpu.dot_dimension_numbers<[1], [0], [0], [1], [0, 0, 1, 1], [], []>} : vector<16x32xf32>, vector<32x4xf32>, vector<16x4xf32> -> vector<16x4xf32>
    %c0_9 = arith.constant 0 : index
    %c0_10 = arith.constant 0 : index
    %10 = vector.load %arg5[%c0_9, %c0_10] : memref<1x4xf32, #tpu.memory_space<vmem>>, vector<1x4xf32>
    %11 = vector.broadcast %10 : vector<1x4xf32> to vector<16x4xf32>
    %12 = arith.addf %9, %11 : vector<16x4xf32>
    %c0_11 = arith.constant 0 : index
    %c0_12 = arith.constant 0 : index
    %13 = vector.load %arg6[%c0_11, %c0_12] : memref<16x4xf32, #tpu.memory_space<vmem>>, vector<16x4xf32>
    tpu.vector_store %arg6[%c0_11, %c0_12], %12 {strides = array<i32>} : memref<16x4xf32, #tpu.memory_space<vmem>>, vector<16x4xf32>,
    return
  }
  func.func @transform_0(%arg0: i32) -> (i32, i32) {
    %c0_i32 = arith.constant 0 : i32
    %c0_i32_0 = arith.constant 0 : i32
    return %arg0, %c0_i32 : i32, i32
  }
  func.func @transform_1(%arg0: i32) -> (i32, i32) {
    %c0_i32 = arith.constant 0 : i32
    %c0_i32_0 = arith.constant 0 : i32
    %c0_i32_1 = arith.constant 0 : i32
    return %c0_i32, %c0_i32_0 : i32, i32
  }
  func.func @transform_2(%arg0: i32) -> (i32, i32) {
    %c0_i32 = arith.constant 0 : i32
    %c0_i32_0 = arith.constant 0 : i32
    %c0_i32_1 = arith.constant 0 : i32
    return %c0_i32, %c0_i32_0 : i32, i32
  }
  func.func @transform_3(%arg0: i32) -> (i32, i32) {
    %c0_i32 = arith.constant 0 : i32
    %c0_i32_0 = arith.constant 0 : i32
    %c0_i32_1 = arith.constant 0 : i32
    return %c0_i32, %c0_i32_0 : i32, i32
  }
  func.func @transform_4(%arg0: i32) -> (i32, i32) {
    %c0_i32 = arith.constant 0 : i32
    %c0_i32_0 = arith.constant 0 : i32
    %c0_i32_1 = arith.constant 0 : i32
    return %c0_i32, %c0_i32_0 : i32, i32
  }
  func.func @transform_5(%arg0: i32) -> (i32, i32) {
    %c0_i32 = arith.constant 0 : i32
    %c0_i32_0 = arith.constant 0 : i32
    return %arg0, %c0_i32 : i32, i32
  }
}

</mosaic_0001>

<llo_original>
// kernel: linear_qnet_forward.1
$region0: #{linear_qnet_forward.1}
  #allocation0 [shape = 'u32[]', space=smem, size = 0x4, offset = 0x4, fixed_abs, tag = 'smem constant byte address 0x4 - core index']
  #allocation1 [shape = 'u32[72,128]{1,0:T(1,128)}', space=vmem, size = 0x9000, scoped, tag = 'internal scratch']
  %s0 = inlined_call_operand.vmem [shape: f32[16,16], index: 0, kind: input, shape index: {}]
  %s1 = inlined_call_operand.vmem [shape: f32[16,32], index: 1, kind: input, shape index: {}]
  %s2 = inlined_call_operand.vmem [shape: f32[1,32], index: 2, kind: input, shape index: {}]
  %s3 = inlined_call_operand.vmem [shape: f32[32,4], index: 3, kind: input, shape index: {}]
  %s4 = inlined_call_operand.vmem [shape: f32[1,4], index: 4, kind: input, shape index: {}]
  %s5 = inlined_call_operand.vmem [shape: f32[16,4], index: 5, kind: output, shape index: {}]
  %s6 = sld [smem:[#allocation0]]
  $region30: #{linear_qnet_forward.1} parent=0
    _
  %s8 = ssub.s32 1, %s6
  %s9 = scalar_select 0, %s8, %s6
  // Predicated region
  $region2: #{linear_qnet_forward.1} parent=0 // pred_check
    _
  $region3: #{linear_qnet_forward.1} parent=0 // pred_check_branch
    %11 = sbr.rel (0) target = $region5
  $region4: #{linear_qnet_forward.1} parent=0 // pred_region
    _
  $region5: #{linear_qnet_forward.1} parent=0 // pred_fallthru
    _
  // Predicated region
  $region6: #{linear_qnet_forward.1} parent=0 // pred_check
    _
  $region7: #{linear_qnet_forward.1} parent=0 // pred_check_branch
    %13 = sbr.rel (0) target = $region9
  $region8: #{linear_qnet_forward.1} parent=0 // pred_region
    _
  $region9: #{linear_qnet_forward.1} parent=0 // pred_fallthru
    _
  // Predicated region
  $region10: #{linear_qnet_forward.1} parent=0 // pred_check
    _
  $region11: #{linear_qnet_forward.1} parent=0 // pred_check_branch
    %15 = sbr.rel (0) target = $region13
  $region12: #{linear_qnet_forward.1} parent=0 // pred_region
    _
  $region13: #{linear_qnet_forward.1} parent=0 // pred_fallthru
    _
  // Predicated region
  $region14: #{linear_qnet_forward.1} parent=0 // pred_check
    _
  $region15: #{linear_qnet_forward.1} parent=0 // pred_check_branch
    %17 = sbr.rel (0) target = $region17
  $region16: #{linear_qnet_forward.1} parent=0 // pred_region
    _
  $region17: #{linear_qnet_forward.1} parent=0 // pred_fallthru
    _
  // Predicated region
  $region18: #{linear_qnet_forward.1} parent=0 // pred_check
    _
  $region19: #{linear_qnet_forward.1} parent=0 // pred_check_branch
    %19 = sbr.rel (0) target = $region21
  $region20: #{linear_qnet_forward.1} parent=0 // pred_region
    _
  $region21: #{linear_qnet_forward.1} parent=0 // pred_fallthru
    _
  %v20 = vld [vmem:[%s0] sm:$0xff]
  %v21 = vld [vmem:[%s0 + $0x8] sm:$0xff]
  %v22 = vld [vmem:[%s1] sm:$0xff]
  %v23 = vld [vmem:[%s1 + $0x8] sm:$0xff]
  %v24 = vld [vmem:[%s2] sm:$0x1]
  %v26 = vperm.slane %v24, 0
  %vm28 = vcmask 130048
  %v30 = vsel %vm28, %v20, 0
  %v33 = vsel %vm28, %v21, 0
  %35 = vmatpush.msra.mxu0 0.0
  %36 = vmatpush.msra.mxu0 0.0
  %37 = vmatpush.msra.mxu0 0.0
  %38 = vmatpush.msra.mxu0 0.0
  %39 = vmatpush.msra.mxu0 0.0
  %40 = vmatpush.msra.mxu0 0.0
  %41 = vmatpush.msra.mxu0 0.0
  %42 = vmatpush.msra.mxu0 0.0
  %43 = vmatpush.msra.mxu0 0.0
  %44 = vmatpush.msra.mxu0 0.0
  %45 = vmatpush.msra.mxu0 0.0
  %46 = vmatpush.msra.mxu0 0.0
  %47 = vmatpush.msra.mxu0 0.0
  %48 = vmatpush.msra.mxu0 0.0
  %49 = vmatpush.msra.mxu0 %v23
  %50 = vmatpush.msra.mxu0 %v22
  %51 = vmatmul.f32.gmra.mxu0 %v30
  %v52 = vpop.f32.mrf.mxu0
  %v53 = vadd.f32 %v26, %v52
  %54 = vmatmul.f32.gmra.mxu0 %v33
  %v55 = vpop.f32.mrf.mxu0
  %v56 = vadd.f32 %v26, %v55
  %57 = vdwg.mxu0
  %v58 = vmax.f32 %v53, 0.0
  %v59 = vmax.f32 %v56, 0.0
  %v60 = vld [vmem:[%s3] sm:$0xff]
  %v61 = vld [vmem:[%s3 + $0x8] sm:$0xff]
  %v62 = vld [vmem:[%s3 + $0x10] sm:$0xff]
  %v63 = vld [vmem:[%s3 + $0x18] sm:$0xff]
  %v64 = vld [vmem:[%s4] sm:$0x1]
  %v66 = vperm.slane %v64, 0
  %vm68 = vcmask 261120
  %v70 = vsel %vm68, %v58, 0
  %v73 = vsel %vm68, %v59, 0
  %75 = vmatpush.msra.mxu0 0.0
  %76 = vmatpush.msra.mxu0 0.0
  %77 = vmatpush.msra.mxu0 0.0
  %78 = vmatpush.msra.mxu0 0.0
  %79 = vmatpush.msra.mxu0 0.0
  %80 = vmatpush.msra.mxu0 0.0
  %81 = vmatpush.msra.mxu0 0.0
  %82 = vmatpush.msra.mxu0 0.0
  %83 = vmatpush.msra.mxu0 0.0
  %84 = vmatpush.msra.mxu0 0.0
  %85 = vmatpush.msra.mxu0 0.0
  %86 = vmatpush.msra.mxu0 0.0
  %87 = vmatpush.msra.mxu0 %v63
  %88 = vmatpush.msra.mxu0 %v62
  %89 = vmatpush.msra.mxu0 %v61
  %90 = vmatpush.msra.mxu0 %v60
  %91 = vmatmul.f32.gmra.mxu0 %v70
  %v92 = vpop.f32.mrf.mxu0
  %v93 = vadd.f32 %v66, %v92
  %94 = vmatmul.f32.gmra.mxu0 %v73
  %v95 = vpop.f32.mrf.mxu0
  %v96 = vadd.f32 %v66, %v95
  %97 = vdwg.mxu0
  %vm98 = vcmask 31744
  %99 = vst.msk [vmem:[%s5] sm:$0xff] %vm98, %v93
  %100 = vst.msk [vmem:[%s5 + $0x8] sm:$0xff] %vm98, %v96
  // Predicated region
  $region22: #{linear_qnet_forward.1} parent=0 // pred_check
    _
  $region23: #{linear_qnet_forward.1} parent=0 // pred_check_branch
    %102 = sbr.rel (0) target = $region25
  $region24: #{linear_qnet_forward.1} parent=0 // pred_region
    _
  $region25: #{linear_qnet_forward.1} parent=0 // pred_fallthru
    _
  // Predicated region
  $region26: #{linear_qnet_forward.1} parent=0 // pred_check
    _
  $region27: #{linear_qnet_forward.1} parent=0 // pred_check_branch
    %104 = sbr.rel (0) target = $region29
  $region28: #{linear_qnet_forward.1} parent=0 // pred_region
    _
  $region29: #{linear_qnet_forward.1} parent=0 // pred_fallthru
    _

</llo_original>
